<compile_context>
chip_gen: v6e
topology: v6e:2x2x1
jax: 0.10.0
libtpu: 0.0.40
codegen_flags: <defaults>
</compile_context>

<pallas_src>
import jax
import jax.numpy as jnp
from jax.experimental import pallas as pl
from jax.experimental.pallas import tpu as pltpu


def _vmem_capacity_bytes():
    """Physical VMEM per TensorCore; conservative 64 MiB (v7x-sized) fallback."""
    try:
        info = pltpu.get_tpu_info()
        for attr in ("vmem_capacity_bytes", "vmem_bytes", "vmem_size_bytes"):
            val = getattr(info, attr, None)
            if val:
                return int(val)
    except Exception:
        pass
    return 64 * 1024 * 1024


def _pick_tile_n(N, T, D, B, x_bytes, w_bytes, o_bytes, vmem_cap):
    """Largest 128-multiple N tile that fits the VMEM budget, with enough grid steps."""
    if N <= 128:
        return N
    # Per-step VMEM cost that scales with tn:
    #   2 x (T, tn) x slabs (double-buffered input, native dtype)
    #   1 x (T, tn) compute-dtype cast temp
    #   2 x (tn, D) output tiles (double-buffered) + 1 x (tn, D) f32 accumulate intermediate
    per_n = 2 * T * x_bytes + T * w_bytes + 2 * D * o_bytes + D * 4
    # Fixed cost: weight (+ slack for a possible second buffer) + bias.
    fixed = 2 * T * D * w_bytes + 2 * D * 4
    budget = int(vmem_cap * 0.70) - fixed - (4 << 20)     # headroom for internal scratch
    n_cap = 4096 if vmem_cap <= (96 << 20) else 8192      # v7x (64 MiB) vs v5e/v6e (128 MiB)
    tn = min(max(budget // per_n, 128), n_cap, N)
    tn = max(128, (tn // 128) * 128)
    # Keep the software pipeline warm and both v7x TensorCores busy.
    while tn > 128 and B * pl.cdiv(N, tn) < 8:
        tn -= 128
    return tn


def _emb_inverted_kernel(x_ref, w_ref, b_ref, o_ref):
    # x_ref: (T, tileN) slab of x[b, :, n0:n0+tileN] at x's *native* dtype (cast here in VMEM)
    # w_ref: (T, D)     W.T in compute dtype, VMEM-resident (constant index_map)
    # b_ref: (1, D)     bias, f32
    # o_ref: (tileN, D) lane-dense output tile (D whole, last dim)
    x_tile = x_ref[...].astype(w_ref.dtype)               # in-VMEM cast; no host-side cast pass
    y = jax.lax.dot_general(
        x_tile, w_ref[...],
        dimension_numbers=(((0,), (0,)), ((), ())),        # contract over T on both operands
        preferred_element_type=jnp.float32,                # f32 MXU accumulation
    )                                                       # (tileN, D)
    o_ref[...] = (y + b_ref[...]).astype(o_ref.dtype)      # f32 bias epilogue, cast on store
    # TODO(synk): training-mode Dropout(0.1) would mask with pltpu.prng_seed/prng_random_bits;
    # eval-mode dropout is the identity, so it is omitted.
    # NOTE: the lhs-contracting-dim-0 dot_general may lower with an XLU transpose of the
    # (T, tileN) tile; hidden while mem-bound — check pl.lower_as_mlir before scaling T/tn
    # into a compute-bound regime.


def embedding_inverted(x, w_t, bias, *, tile_n=None,
                       compute_dtype=jnp.bfloat16, out_dtype=None):
    """Inverted embedding: [B, T, N] -> [B, N, D] (permute + Linear(T, D); eval-mode dropout).

    Args:
      x:     [B, T, N] at its native dtype (f32 is fine; the cast happens in-kernel).
      w_t:   [T, D]    nn.Linear(T, D) weight, already transposed (W.T).
      bias:  [D]
      tile_n: optional explicit N tile; by default derived from the VMEM budget.
      out_dtype: defaults to x.dtype (avoid f32 writeback — it dominates HBM traffic).
    Returns:
      [B, N, D]
    """
    B, T, N = x.shape
    Tw, D = w_t.shape
    assert Tw == T, "weight time dim must match x time dim"
    out_dtype = jnp.dtype(out_dtype or x.dtype)
    compute_dtype = jnp.dtype(compute_dtype)

    # The weight is small and reused by every grid step: cast it once on the host.
    # x is deliberately NOT cast on the host (that would add a full read+write HBM pass over
    # the largest input); the kernel casts each (T, tn) tile in VMEM instead.
    if w_t.dtype != compute_dtype:
        w_t = w_t.astype(compute_dtype)
    bias2d = bias.reshape(1, D).astype(jnp.float32)

    x_bytes = x.dtype.itemsize
    w_bytes = w_t.dtype.itemsize
    o_bytes = out_dtype.itemsize
    vmem_cap = _vmem_capacity_bytes()

    if tile_n is None:
        tn = _pick_tile_n(N, T, D, B, x_bytes, w_bytes, o_bytes, vmem_cap)
    else:
        tn = min(int(tile_n), N)
        if N >= 128:
            tn = max(128, (tn // 128) * 128)
    grid = (B, pl.cdiv(N, tn))

    # Explicit scoped-VMEM limit: the derived tile can exceed the 16/32 MiB defaults.
    per_n = 2 * T * x_bytes + T * w_bytes + 2 * D * o_bytes + D * 4
    vmem_need = 2 * T * D * w_bytes + 2 * D * 4 + per_n * tn + (4 << 20)
    vmem_limit = int(min(max(vmem_need, 32 << 20), int(vmem_cap * 0.9)))

    cost = pl.CostEstimate(
        flops=2 * B * N * T * D,
        transcendentals=0,
        bytes_accessed=(x.size * x_bytes + w_t.size * w_bytes
                        + bias2d.size * 4 + B * N * D * o_bytes),
    )

    def _call(single_buffer_invariants):
        const_kwargs = (
            dict(pipeline_mode=pl.Buffered(1)) if single_buffer_invariants else {}
        )
        in_specs = [
            # (T, tn) slab straight from [B, T, N]; no host transpose, batch dim squeezed.
            # (If profiling shows exposed DMA at large tn, add pipeline_mode=pl.Buffered(3).)
            pl.BlockSpec((None, T, tn), lambda b, n: (b, 0, n)),
            # Constant index_maps: VMEM-resident across all steps; a single buffer suffices.
            pl.BlockSpec((T, D), lambda b, n: (0, 0), **const_kwargs),
            pl.BlockSpec((1, D), lambda b, n: (0, 0), **const_kwargs),
        ]
        return pl.pallas_call(
            _emb_inverted_kernel,
            out_shape=jax.ShapeDtypeStruct((B, N, D), out_dtype),
            grid=grid,
            in_specs=in_specs,
            out_specs=pl.BlockSpec((None, tn, D), lambda b, n: (b, n, 0)),
            compiler_params=pltpu.CompilerParams(
                dimension_semantics=("parallel", "parallel"),
                vmem_limit_bytes=vmem_limit,
            ),
            cost_estimate=cost,
        )(x, w_t, bias2d)

    try:
        return _call(True)
    except Exception:
        # pipeline_mode=pl.Buffered(1) unsupported on this jax version: fall back to the
        # default double-buffering (still correct, just one dead T*D VMEM buffer).
        return _call(False)


if __name__ == "__main__":
    # Small demo shapes: B=2 batches, T=8 time steps, N=256 variates, D=128 embedding dim.
    # The auto tile shrinks to tn=128 so the grid is (2, 2): >1 step per parallel axis, so
    # both v7x TensorCores get work and the software pipeline has something to overlap.
    B, T, N, D = 2, 8, 256, 128

    key = jax.random.PRNGKey(0)
    k_x, k_w, k_b = jax.random.split(key, 3)

    # f32 inputs, as the PyTorch module would see them; the kernel casts x tiles to bf16 in VMEM.
    x = jax.random.normal(k_x, (B, T, N), dtype=jnp.float32)          # [B, T, N]
    bound = 1.0 / (T ** 0.5)                                          # nn.Linear(T, D)-style init
    w = jax.random.uniform(k_w, (D, T), minval=-bound, maxval=bound, dtype=jnp.float32)
    bias = jax.random.uniform(k_b, (D,), minval=-bound, maxval=bound, dtype=jnp.float32)
    w_t = w.T                                                         # [T, D]

    # bf16 writeback: the [B, N, D] output is the dominant HBM term (D >> T), so keep it narrow.
    out = embedding_inverted(x, w_t, bias, out_dtype=jnp.bfloat16)
    out = jax.block_until_ready(out)

    # Reference: same bf16-quantized MXU operands, f32 math (permute + linear; dropout = identity).
    ref = jnp.einsum(
        "btn,td->bnd",
        x.astype(jnp.bfloat16).astype(jnp.float32),
        w_t.astype(jnp.bfloat16).astype(jnp.float32),
        precision=jax.lax.Precision.HIGHEST,
    ) + bias
    assert out.shape == (B, N, D)
    err = float(jnp.max(jnp.abs(out.astype(jnp.float32) - ref)))
    assert err < 2e-2, err
    print("KERNEL_OK")
</pallas_src>

<mosaic_0001>
module attributes {stable_mosaic.version = 11 : i64} {
  func.func @_emb_inverted_kernel(%arg0: i32, %arg1: i32, %arg2: memref<1x8x128xf32, #tpu.memory_space<vmem>>, %arg3: memref<8x128xbf16, #tpu.memory_space<vmem>>, %arg4: memref<1x128xf32, #tpu.memory_space<vmem>>, %arg5: memref<1x128x128xbf16, #tpu.memory_space<vmem>>) attributes {dimension_semantics = [#tpu.dimension_semantics<parallel>, #tpu.dimension_semantics<parallel>], iteration_bounds = array<i64: 2, 2>, scalar_prefetch = 0 : i64, scratch_operands = 0 : i64, tpu.core_type = #tpu.core_type<tc>, window_params = [{transform_indices = @transform_0, window_bounds = array<i64: 1, 8, 128>}, {pipeline_mode = #tpu.pipeline_mode<synchronous>, transform_indices = @transform_1, window_bounds = array<i64: 8, 128>}, {pipeline_mode = #tpu.pipeline_mode<synchronous>, transform_indices = @transform_2, window_bounds = array<i64: 1, 128>}, {transform_indices = @transform_3, window_bounds = array<i64: 1, 128, 128>}]} {
    %c0 = arith.constant 0 : index
    %c0_0 = arith.constant 0 : index
    %c0_1 = arith.constant 0 : index
    %0 = vector.load %arg2[%c0, %c0_0, %c0_1] : memref<1x8x128xf32, #tpu.memory_space<vmem>>, vector<1x8x128xf32>
    %1 = vector.shape_cast %0 : vector<1x8x128xf32> to vector<8x128xf32>
    %2 = arith.truncf %1 : vector<8x128xf32> to vector<8x128xbf16>
    %c0_2 = arith.constant 0 : index
    %c0_3 = arith.constant 0 : index
    %3 = vector.load %arg3[%c0_2, %c0_3] : memref<8x128xbf16, #tpu.memory_space<vmem>>, vector<8x128xbf16>
    %cst = arith.constant dense<0.000000e+00> : vector<128x128xf32>
    %4 = tpu.matmul %2, %3, %cst {dimension_numbers = #tpu.dot_dimension_numbers<[0], [0], [1], [1], [0, 1, 1, 1], [], []>} : vector<8x128xbf16>, vector<8x128xbf16>, vector<128x128xf32> -> vector<128x128xf32>
    %c0_4 = arith.constant 0 : index
    %c0_5 = arith.constant 0 : index
    %5 = vector.load %arg4[%c0_4, %c0_5] : memref<1x128xf32, #tpu.memory_space<vmem>>, vector<1x128xf32>
    %6 = vector.broadcast %5 : vector<1x128xf32> to vector<128x128xf32>
    %7 = arith.addf %4, %6 : vector<128x128xf32>
    %8 = arith.truncf %7 : vector<128x128xf32> to vector<128x128xbf16>
    %c0_6 = arith.constant 0 : index
    %c0_7 = arith.constant 0 : index
    %c0_8 = arith.constant 0 : index
    %9 = vector.load %arg5[%c0_6, %c0_7, %c0_8] : memref<1x128x128xbf16, #tpu.memory_space<vmem>>, vector<1x128x128xbf16>
    %10 = vector.shape_cast %9 : vector<1x128x128xbf16> to vector<128x128xbf16>
    %11 = vector.shape_cast %8 : vector<128x128xbf16> to vector<1x128x128xbf16>
    tpu.vector_store %arg5[%c0_6, %c0_7, %c0_8], %11 {strides = array<i32>} : memref<1x128x128xbf16, #tpu.memory_space<vmem>>, vector<1x128x128xbf16>,
    return
  }
  func.func @transform_0(%arg0: i32, %arg1: i32) -> (i32, i32, i32) {
    %c0_i32 = arith.constant 0 : i32
    %c0_i32_0 = arith.constant 0 : i32
    return %arg0, %c0_i32, %arg1 : i32, i32, i32
  }
  func.func @transform_1(%arg0: i32, %arg1: i32) -> (i32, i32) {
    %c0_i32 = arith.constant 0 : i32
    %c0_i32_0 = arith.constant 0 : i32
    %c0_i32_1 = arith.constant 0 : i32
    return %c0_i32, %c0_i32_0 : i32, i32
  }
  func.func @transform_2(%arg0: i32, %arg1: i32) -> (i32, i32) {
    %c0_i32 = arith.constant 0 : i32
    %c0_i32_0 = arith.constant 0 : i32
    %c0_i32_1 = arith.constant 0 : i32
    return %c0_i32, %c0_i32_0 : i32, i32
  }
  func.func @transform_3(%arg0: i32, %arg1: i32) -> (i32, i32, i32) {
    %c0_i32 = arith.constant 0 : i32
    %c0_i32_0 = arith.constant 0 : i32
    return %arg0, %arg1, %c0_i32 : i32, i32, i32
  }
}

module attributes {stable_mosaic.version = 11 : i64} {
  func.func @_emb_inverted_kernel(%arg0: i32, %arg1: i32, %arg2: memref<1x8x128xf32, #tpu.memory_space<vmem>>, %arg3: memref<8x128xbf16, #tpu.memory_space<vmem>>, %arg4: memref<1x128xf32, #tpu.memory_space<vmem>>, %arg5: memref<1x128x128xbf16, #tpu.memory_space<vmem>>) attributes {dimension_semantics = [#tpu.dimension_semantics<parallel>, #tpu.dimension_semantics<parallel>], iteration_bounds = array<i64: 2, 2>, scalar_prefetch = 0 : i64, scratch_operands = 0 : i64, tpu.core_type = #tpu.core_type<tc>, window_params = [{transform_indices = @transform_0, window_bounds = array<i64: 1, 8, 128>}, {pipeline_mode = #tpu.pipeline_mode<synchronous>, transform_indices = @transform_1, window_bounds = array<i64: 8, 128>}, {pipeline_mode = #tpu.pipeline_mode<synchronous>, transform_indices = @transform_2, window_bounds = array<i64: 1, 128>}, {transform_indices = @transform_3, window_bounds = array<i64: 1, 128, 128>}]} {
    %c0 = arith.constant 0 : index
    %c0_0 = arith.constant 0 : index
    %c0_1 = arith.constant 0 : index
    %0 = vector.load %arg2[%c0, %c0_0, %c0_1] : memref<1x8x128xf32, #tpu.memory_space<vmem>>, vector<1x8x128xf32>
    %1 = vector.shape_cast %0 : vector<1x8x128xf32> to vector<8x128xf32>
    %2 = arith.truncf %1 : vector<8x128xf32> to vector<8x128xbf16>
    %c0_2 = arith.constant 0 : index
    %c0_3 = arith.constant 0 : index
    %3 = vector.load %arg3[%c0_2, %c0_3] : memref<8x128xbf16, #tpu.memory_space<vmem>>, vector<8x128xbf16>
    %cst = arith.constant dense<0.000000e+00> : vector<128x128xf32>
    %4 = tpu.matmul %2, %3, %cst {dimension_numbers = #tpu.dot_dimension_numbers<[0], [0], [1], [1], [0, 1, 1, 1], [], []>} : vector<8x128xbf16>, vector<8x128xbf16>, vector<128x128xf32> -> vector<128x128xf32>
    %c0_4 = arith.constant 0 : index
    %c0_5 = arith.constant 0 : index
    %5 = vector.load %arg4[%c0_4, %c0_5] : memref<1x128xf32, #tpu.memory_space<vmem>>, vector<1x128xf32>
    %6 = vector.broadcast %5 : vector<1x128xf32> to vector<128x128xf32>
    %7 = arith.addf %4, %6 : vector<128x128xf32>
    %8 = arith.truncf %7 : vector<128x128xf32> to vector<128x128xbf16>
    %c0_6 = arith.constant 0 : index
    %c0_7 = arith.constant 0 : index
    %c0_8 = arith.constant 0 : index
    %9 = vector.load %arg5[%c0_6, %c0_7, %c0_8] : memref<1x128x128xbf16, #tpu.memory_space<vmem>>, vector<1x128x128xbf16>
    %10 = vector.shape_cast %9 : vector<1x128x128xbf16> to vector<128x128xbf16>
    %11 = vector.shape_cast %8 : vector<128x128xbf16> to vector<1x128x128xbf16>
    tpu.vector_store %arg5[%c0_6, %c0_7, %c0_8], %11 {strides = array<i32>} : memref<1x128x128xbf16, #tpu.memory_space<vmem>>, vector<1x128x128xbf16>,
    return
  }
  func.func @transform_0(%arg0: i32, %arg1: i32) -> (i32, i32, i32) {
    %c0_i32 = arith.constant 0 : i32
    %c0_i32_0 = arith.constant 0 : i32
    return %arg0, %c0_i32, %arg1 : i32, i32, i32
  }
  func.func @transform_1(%arg0: i32, %arg1: i32) -> (i32, i32) {
    %c0_i32 = arith.constant 0 : i32
    %c0_i32_0 = arith.constant 0 : i32
    %c0_i32_1 = arith.constant 0 : i32
    return %c0_i32, %c0_i32_0 : i32, i32
  }
  func.func @transform_2(%arg0: i32, %arg1: i32) -> (i32, i32) {
    %c0_i32 = arith.constant 0 : i32
    %c0_i32_0 = arith.constant 0 : i32
    %c0_i32_1 = arith.constant 0 : i32
    return %c0_i32, %c0_i32_0 : i32, i32
  }
  func.func @transform_3(%arg0: i32, %arg1: i32) -> (i32, i32, i32) {
    %c0_i32 = arith.constant 0 : i32
    %c0_i32_0 = arith.constant 0 : i32
    return %arg0, %arg1, %c0_i32 : i32, i32, i32
  }
}

</mosaic_0001>

<llo_original>
// kernel: tpu_custom_call.1
$region0: #{tpu_custom_call.1}
  #allocation0 [shape = 'u32[]', space=smem, size = 0x4, offset = 0x4, fixed_abs, tag = 'smem constant byte address 0x4 - core index']
  #allocation1 [shape = 'u32[144,128]{1,0:T(1,128)}', space=vmem, size = 0x12000, scoped, tag = 'internal scratch']
  %s0 = inlined_call_operand.hbm [shape: f32[2,8,256], index: 0, kind: input, shape index: {}]
  %s1 = inlined_call_operand.hbm [shape: bf16[8,128], index: 1, kind: input, shape index: {}]
  %s2 = inlined_call_operand.vmem [shape: f32[1,128], index: 2, kind: input, shape index: {}]
  %s3 = inlined_call_operand.hbm [shape: bf16[2,256,128], index: 3, kind: output, shape index: {}]
  %s4 = sld [smem:[#allocation0]]
  $region53: #{tpu_custom_call.1} parent=0
    _
  %s6 = ssub.s32 1, %s4
  %s7 = scalar_select 0, %s6, %s4
  $region1: #{tpu_custom_call.1} parent=0
    #allocation2 [shape = 'u8[8192]{0}', space=vmem, size = 0x2000, scoped, tag = 'input window, operand 0']
    #allocation3 [shape = 's32[2]{0}', space=sflag, size = 0x8, scoped, tag = 'scoped memory for tpu_custom_call.1']
    #allocation4 [shape = 's32[2]{0}', space=sflag, size = 0x8, scoped, tag = 'scoped memory for tpu_custom_call.1']
    #allocation5 [shape = 'u8[2048]{0}', space=vmem, size = 0x800, scoped, tag = 'input window, operand 1, single buffered']
    #allocation6 [shape = 's32[1]{0}', space=sflag, size = 0x4, scoped, tag = 'scoped memory for tpu_custom_call.1']
    #allocation7 [shape = 'u8[65536]{0}', space=vmem, size = 0x10000, scoped, tag = 'output window, operand 0']
    %8 = vsyncpa [#allocation3], 0
    %s9 = scalar_lea.sflag [#allocation3], 1
    %10 = vsyncpa %s9, 0
    %11 = vsyncpa [#allocation6], 0
    %12 = vsyncpa [#allocation4], 0
    %s13 = scalar_lea.sflag [#allocation4], 1
    %14 = vsyncpa %s13, 0
    loop: start=0, step=1, limit=6
    $region2: #{tpu_custom_call.1} parent=1 // loop_pre_header
      _
    $region3: #{tpu_custom_call.1} parent=1 // loop_header
      %s16 = sphi 0, %s20
      %p17 = scmp.ge.s32.totalorder %s16, 6
      %s23 = sphi 0, %s35
      %s24 = sphi 0, %s31
      %s25 = sphi 0, %s23
      %s26 = sphi 0, %s24
      %s27 = sphi 0, %s25
      %s28 = sphi 0, %s26
      %s40 = sphi 0, %s42
      %s43 = sphi 0, %s40
      %s44 = sphi 0, %s43
      %s60 = sphi 0, %s44
      %s64 = sphi 0, %s64
      %s66 = sphi 0, %s64
      %s67 = sphi 0, %s66
      %s81 = sphi 0, %s67
      %s85 = sphi 0, %s85
      %s87 = sphi 0, %s85
      %s88 = sphi 0, %s87
      %s102 = sphi 0, %s88
      %s110 = sphi 0, %s112
      %s113 = sphi 0, %s110
      %s114 = sphi 0, %s113
      %s130 = sphi 0, %s114
    $region4: #{tpu_custom_call.1} parent=1 // loop_header_branch
      %19 = sbr.rel (%p17) target = $region8
    $region5: #{tpu_custom_call.1} parent=1 // loop_body
      %s21 = ssub.s32 %s16, 1
      %s22 = ssub.s32 %s16, 2
      %s29 = sadd.s32 1, %s24
      %p30 = scmp.ge.s32.totalorder %s29, 2
      %s31 = scalar_select %p30, 0, %s29
      %s32 = sadd.s32 1, %s23
      %s33 = scalar_select %p30, %s32, %s23
      %p34 = scmp.ge.s32.totalorder %s33, 2
      %s35 = scalar_select %p34, 0, %s33
      %s36 = ssub.s32 %s23, %s35
      %s37 = ssub.s32 %s24, %s31
      %s38 = sor.u32 %s36, %s37
      %p39 = scmp.eq.s32.totalorder %s38, 0
      %s41 = sadd.s32 %s40, 1
      %s42 = scalar_select %p39, %s40, %s41
      %p45 = pneg %p39
      %p46 = scmp.eq.s32.totalorder %s16, 3
      %p47 = por %p45, %p46
      %p48 = scmp.ne.s32.totalorder %s40, %s43
      %p49 = scmp.eq.s32.totalorder %s16, 0
      %p50 = por %p48, %p49
      %p51 = scmp.ne.s32.totalorder %s40, %s43
      %p52 = scmp.eq.s32.totalorder %s21, 3
      %p53 = por %p51, %p52
      %p54 = scmp.ne.s32.totalorder %s43, %s44
      %p55 = scmp.eq.s32.totalorder %s21, 0
      %p56 = por %p54, %p55
      %p57 = scmp.ne.s32.totalorder %s43, %s44
      %p58 = scmp.eq.s32.totalorder %s22, 3
      %p59 = por %p57, %p58
      %p61 = scmp.ne.s32.totalorder %s44, %s60
      %p62 = scmp.eq.s32.totalorder %s22, 0
      %p63 = por %p61, %p62
      %s65 = sadd.s32 %s64, 1
      %p68 = scmp.eq.s32.totalorder %s16, 3
      %p69 = scmp.ne.s32.totalorder %s64, %s66
      %p70 = scmp.eq.s32.totalorder %s16, 0
      %p71 = por %p69, %p70
      %p72 = scmp.ne.s32.totalorder %s64, %s66
      %p73 = scmp.eq.s32.totalorder %s21, 3
      %p74 = por %p72, %p73
      %p75 = scmp.ne.s32.totalorder %s66, %s67
      %p76 = scmp.eq.s32.totalorder %s21, 0
      %p77 = por %p75, %p76
      %p78 = scmp.ne.s32.totalorder %s66, %s67
      %p79 = scmp.eq.s32.totalorder %s22, 3
      %p80 = por %p78, %p79
      %p82 = scmp.ne.s32.totalorder %s67, %s81
      %p83 = scmp.eq.s32.totalorder %s22, 0
      %p84 = por %p82, %p83
      %s86 = sadd.s32 %s85, 1
      %p89 = scmp.eq.s32.totalorder %s16, 3
      %p90 = scmp.ne.s32.totalorder %s85, %s87
      %p91 = scmp.eq.s32.totalorder %s16, 0
      %p92 = por %p90, %p91
      %p93 = scmp.ne.s32.totalorder %s85, %s87
      %p94 = scmp.eq.s32.totalorder %s21, 3
      %p95 = por %p93, %p94
      %p96 = scmp.ne.s32.totalorder %s87, %s88
      %p97 = scmp.eq.s32.totalorder %s21, 0
      %p98 = por %p96, %p97
      %p99 = scmp.ne.s32.totalorder %s87, %s88
      %p100 = scmp.eq.s32.totalorder %s22, 3
      %p101 = por %p99, %p100
      %p103 = scmp.ne.s32.totalorder %s88, %s102
      %p104 = scmp.eq.s32.totalorder %s22, 0
      %p105 = por %p103, %p104
      %s106 = ssub.s32 %s23, %s35
      %s107 = ssub.s32 %s24, %s31
      %s108 = sor.u32 %s106, %s107
      %p109 = scmp.eq.s32.totalorder %s108, 0
      %s111 = sadd.s32 %s110, 1
      %s112 = scalar_select %p109, %s110, %s111
      %p115 = pneg %p109
      %p116 = scmp.eq.s32.totalorder %s16, 3
      %p117 = por %p115, %p116
      %p118 = scmp.ne.s32.totalorder %s110, %s113
      %p119 = scmp.eq.s32.totalorder %s16, 0
      %p120 = por %p118, %p119
      %p121 = scmp.ne.s32.totalorder %s110, %s113
      %p122 = scmp.eq.s32.totalorder %s21, 3
      %p123 = por %p121, %p122
      %p124 = scmp.ne.s32.totalorder %s113, %s114
      %p125 = scmp.eq.s32.totalorder %s21, 0
      %p126 = por %p124, %p125
      %p127 = scmp.ne.s32.totalorder %s113, %s114
      %p128 = scmp.eq.s32.totalorder %s22, 3
      %p129 = por %p127, %p128
      %p131 = scmp.ne.s32.totalorder %s114, %s130
      %p132 = scmp.eq.s32.totalorder %s22, 0
      %p133 = por %p131, %p132
      %p134 = scmp.le.s32.totalorder 1, %s16
      %p135 = scmp.lt.s32.totalorder %s16, 5
      %p136 = pnand %p134, %p135
      %p137 = pneg %p136
      // Predicated region
      $region9: #{tpu_custom_call.1} parent=5 // pred_check
        _
      $region10: #{tpu_custom_call.1} parent=5 // pred_check_branch
        %139 = sbr.rel (%p136) target = $region12
      $region11: #{tpu_custom_call.1} parent=5 // pred_region
        %s140 = ssub.s32 %s16, 1
        // Predicated region
        $region13: #{tpu_custom_call.1} parent=11 // pred_check
          %p141 = pneg %p77
        $region14: #{tpu_custom_call.1} parent=11 // pred_check_branch
          %143 = sbr.rel (%p141) target = $region16
        $region15: #{tpu_custom_call.1} parent=11 // pred_region
          %s145 = ssub.s32 64, 64
          %146 = vsyncadd [#allocation6], %s145
          %s148 = sshll.u32 [#allocation5], 4
          %s149 = int_to_ptr.vmem [resolvable:$true] %s148
          %151 = dma.hbm_to_vmem [thread:$0]  %s1, 64, %s149, [#allocation6]
        $region16: #{tpu_custom_call.1} parent=11 // pred_fallthru
          _
        // Predicated region
        $region17: #{tpu_custom_call.1} parent=11 // pred_check
          %p152 = pneg %p98
        $region18: #{tpu_custom_call.1} parent=11 // pred_check_branch
          %154 = sbr.rel (%p152) target = $region20
        $region19: #{tpu_custom_call.1} parent=11 // pred_region
          _
        $region20: #{tpu_custom_call.1} parent=11 // pred_fallthru
          _
      $region12: #{tpu_custom_call.1} parent=5 // pred_fallthru
        _
      %p155 = scmp.lt.s32.totalorder %s16, 4
      // Predicated region
      $region21: #{tpu_custom_call.1} parent=5 // pred_check
        %p156 = pneg %p155
      $region22: #{tpu_custom_call.1} parent=5 // pred_check_branch
        %158 = sbr.rel (%p156) target = $region24
      $region23: #{tpu_custom_call.1} parent=5 // pred_region
        // Predicated region
        $region25: #{tpu_custom_call.1} parent=23 // pred_check
          %p159 = pneg %p50
        $region26: #{tpu_custom_call.1} parent=23 // pred_check_branch
          %161 = sbr.rel (%p159) target = $region28
        $region27: #{tpu_custom_call.1} parent=23 // pred_region
          %s162 = sand.u32 %s40, 1
          %s163 = scalar_lea.sflag [#allocation3], %s162
          %s164 = sand.u32 %s40, 1
          %s165 = smul.addr %s164, 8
          %s166 = scalar_lea.vmem [#allocation2], %s165
          %s168 = ssub.s32 128, 128
          %169 = vsyncadd %s163, %s168
          %s170 = smul.addr %s23, 2
          %s171 = sadd.s32 %s24, %s170
          %s172 = smul.addr %s171, 128
          %s173 = scalar_lea.hbm %s0, %s172
          %s175 = sshll.u32 %s166, 4
          %s176 = int_to_ptr.vmem [resolvable:$true] %s175
          %178 = dma.hbm_to_vmem [thread:$0]  %s173, 128, %s176, %s163
        $region28: #{tpu_custom_call.1} parent=23 // pred_fallthru
          _
      $region24: #{tpu_custom_call.1} parent=5 // pred_fallthru
        _
      %p179 = scmp.le.s32.totalorder 1, %s16
      %p180 = scmp.lt.s32.totalorder %s16, 5
      %p181 = pnand %p179, %p180
      %p182 = pneg %p181
      // Predicated region
      $region29: #{tpu_custom_call.1} parent=5 // pred_check
        _
      $region30: #{tpu_custom_call.1} parent=5 // pred_check_branch
        %184 = sbr.rel (%p181) target = $region32
      $region31: #{tpu_custom_call.1} parent=5 // pred_region
        %s185 = ssub.s32 %s16, 1
        %s186 = sand.u32 %s43, 1
        %s187 = scalar_lea.sflag [#allocation3], %s186
        %s188 = sand.u32 %s43, 1
        %s189 = smul.addr %s188, 8
        %s190 = scalar_lea.vmem [#allocation2], %s189
        // Predicated region
        $region33: #{tpu_custom_call.1} parent=31 // pred_check
          %p191 = pneg %p56
        $region34: #{tpu_custom_call.1} parent=31 // pred_check_branch
          %193 = sbr.rel (%p191) target = $region36
        $region35: #{tpu_custom_call.1} parent=31 // pred_region
          %194 = dma.done %s187, 128
        $region36: #{tpu_custom_call.1} parent=31 // pred_fallthru
          _
        // Predicated region
        $region37: #{tpu_custom_call.1} parent=31 // pred_check
          %p195 = pneg %p77
        $region38: #{tpu_custom_call.1} parent=31 // pred_check_branch
          %197 = sbr.rel (%p195) target = $region40
        $region39: #{tpu_custom_call.1} parent=31 // pred_region
          %198 = dma.done [#allocation6], 64
        $region40: #{tpu_custom_call.1} parent=31 // pred_fallthru
          _
        %s199 = sand.u32 %s43, 1
        %s200 = scalar_lea.sflag [#allocation3], %s199
        %s201 = sand.u32 %s43, 1
        %s202 = smul.addr %s201, 8
        %s203 = scalar_lea.vmem [#allocation2], %s202
        %p204 = pneg %p56
        %p205 = pneg %p53
        %p206 = pneg %p77
        %p207 = pneg %p74
        %p208 = pneg %p98
        %p209 = pneg %p95
        %p210 = pneg %p126
        %p211 = pneg %p123
        %s212 = sand.u32 %s113, 1
        %s213 = scalar_lea.sflag [#allocation4], %s212
        %s214 = sand.u32 %s113, 1
        %s215 = smul.addr %s214, 64
        %s216 = scalar_lea.vmem [#allocation7], %s215
        %s217 = smul.u32 16, %s26
        %v219 = vld [vmem:[%s190] sm:$0xff]
        %v220 = vpack.c.bf16 %v219, %v219
        %v221 = vld [vmem:[#allocation5] sm:$0xf]
        %v222 = vld [vmem:[%s2] sm:$0x1]
        %v224 = vlaneseq
        %v225 = vshrl.u32 %v224, 7
        %v226 = vsub.s32 0, %v225
        %v227 = vrot.slane %v222, %v226
        %229 = vxpose.xlu0.c.b16.start [1/8] %v220, 128
        %230 = vxpose.xlu0.c.b16.cont [2/8] 0, 128
        %231 = vxpose.xlu0.c.b16.cont [3/8] 0, 128
        %232 = vxpose.xlu0.c.b16.cont [4/8] 0, 128
        %233 = vxpose.xlu0.c.b16.cont [5/8] 0, 128
        %234 = vxpose.xlu0.c.b16.cont [6/8] 0, 128
        %235 = vxpose.xlu0.c.b16.cont [7/8] 0, 128
        %236 = vxpose.xlu0.c.b16.end [8/8] 0, 128
        %v237 = vpop.trf.xlu0
        %v238 = vpop.trf.xlu0
        %v239 = vpop.trf.xlu0
        %v240 = vpop.trf.xlu0
        %v241 = vpop.trf.xlu0
        %v242 = vpop.trf.xlu0
        %v243 = vpop.trf.xlu0
        %v244 = vpop.trf.xlu0
        %vm245 = vcmask 64512
        %v247 = vsel %vm245, %v237, 0
        %v250 = vsel %vm245, %v238, 0
        %v253 = vsel %vm245, %v239, 0
        %v256 = vsel %vm245, %v240, 0
        %v259 = vsel %vm245, %v241, 0
        %v262 = vsel %vm245, %v242, 0
        %v265 = vsel %vm245, %v243, 0
        %v268 = vsel %vm245, %v244, 0
        %vm270 = vcmask 1043456
        %v272 = vsel %vm270, %v221, 0
        %274 = vmatprep.subr.bf16.mxu0 0
        %275 = vmatpush1.bf16.msra.mxu0 0
        %276 = vmatprep.subr.bf16.mxu0 0
        %277 = vmatpush1.bf16.msra.mxu0 0
        %278 = vmatprep.subr.bf16.mxu0 0
        %279 = vmatpush1.bf16.msra.mxu0 0
        %280 = vmatprep.subr.bf16.mxu0 0
        %281 = vmatpush1.bf16.msra.mxu0 0
        %282 = vmatprep.subr.bf16.mxu0 0
        %283 = vmatpush1.bf16.msra.mxu0 0
        %284 = vmatprep.subr.bf16.mxu0 0
        %285 = vmatpush1.bf16.msra.mxu0 0
        %286 = vmatprep.subr.bf16.mxu0 0
        %287 = vmatpush1.bf16.msra.mxu0 0
        %288 = vmatprep.subr.bf16.mxu0 0
        %289 = vmatpush1.bf16.msra.mxu0 %v272
        %290 = vmatprep.subr.bf16.mxu0 0
        %291 = vmatpush2.bf16.msra.mxu0 0
        %292 = vmatprep.subr.bf16.mxu0 0
        %293 = vmatpush2.bf16.msra.mxu0 0
        %294 = vmatprep.subr.bf16.mxu0 0
        %295 = vmatpush2.bf16.msra.mxu0 0
        %296 = vmatprep.subr.bf16.mxu0 0
        %297 = vmatpush2.bf16.msra.mxu0 0
        %298 = vmatprep.subr.bf16.mxu0 0
        %299 = vmatpush2.bf16.msra.mxu0 0
        %300 = vmatprep.subr.bf16.mxu0 0
        %301 = vmatpush2.bf16.msra.mxu0 0
        %302 = vmatprep.subr.bf16.mxu0 0
        %303 = vmatpush2.bf16.msra.mxu0 0
        %304 = vmatprep.subr.bf16.mxu0 0
        %305 = vmatpush2.bf16.msra.mxu0 0
        %306 = vmatprep.mubr.bf16.mxu0 0
        %307 = vmatmul.mubr.bf16.gmra.mxu0 %v247
        %v308 = vpop.f32.mrf.mxu0
        %v309 = vadd.f32 %v227, %v308
        %v310 = vpop.f32.mrf.mxu0
        %v311 = vpop.f32.mrf.mxu0
        %v312 = vadd.f32 %v227, %v311
        %v313 = vpop.f32.mrf.mxu0
        %314 = vmatprep.mubr.bf16.mxu0 0
        %315 = vmatmul.mubr.bf16.gmra.mxu0 %v250
        %v316 = vpop.f32.mrf.mxu0
        %v317 = vadd.f32 %v227, %v316
        %v318 = vpop.f32.mrf.mxu0
        %v319 = vpop.f32.mrf.mxu0
        %v320 = vadd.f32 %v227, %v319
        %v321 = vpop.f32.mrf.mxu0
        %322 = vmatprep.mubr.bf16.mxu0 0
        %323 = vmatmul.mubr.bf16.gmra.mxu0 %v253
        %v324 = vpop.f32.mrf.mxu0
        %v325 = vadd.f32 %v227, %v324
        %v326 = vpop.f32.mrf.mxu0
        %v327 = vpop.f32.mrf.mxu0
        %v328 = vadd.f32 %v227, %v327
        %v329 = vpop.f32.mrf.mxu0
        %330 = vmatprep.mubr.bf16.mxu0 0
        %331 = vmatmul.mubr.bf16.gmra.mxu0 %v256
        %v332 = vpop.f32.mrf.mxu0
        %v333 = vadd.f32 %v227, %v332
        %v334 = vpop.f32.mrf.mxu0
        %v335 = vpop.f32.mrf.mxu0
        %v336 = vadd.f32 %v227, %v335
        %v337 = vpop.f32.mrf.mxu0
        %338 = vmatprep.mubr.bf16.mxu0 0
        %339 = vmatmul.mubr.bf16.gmra.mxu0 %v259
        %v340 = vpop.f32.mrf.mxu0
        %v341 = vadd.f32 %v227, %v340
        %v342 = vpop.f32.mrf.mxu0
        %v343 = vpop.f32.mrf.mxu0
        %v344 = vadd.f32 %v227, %v343
        %v345 = vpop.f32.mrf.mxu0
        %346 = vmatprep.mubr.bf16.mxu0 0
        %347 = vmatmul.mubr.bf16.gmra.mxu0 %v262
        %v348 = vpop.f32.mrf.mxu0
        %v349 = vadd.f32 %v227, %v348
        %v350 = vpop.f32.mrf.mxu0
        %v351 = vpop.f32.mrf.mxu0
        %v352 = vadd.f32 %v227, %v351
        %v353 = vpop.f32.mrf.mxu0
        %354 = vmatprep.mubr.bf16.mxu0 0
        %355 = vmatmul.mubr.bf16.gmra.mxu0 %v265
        %v356 = vpop.f32.mrf.mxu0
        %v357 = vadd.f32 %v227, %v356
        %v358 = vpop.f32.mrf.mxu0
        %v359 = vpop.f32.mrf.mxu0
        %v360 = vadd.f32 %v227, %v359
        %v361 = vpop.f32.mrf.mxu0
        %362 = vmatprep.mubr.bf16.mxu0 0
        %363 = vmatmul.mubr.bf16.gmra.mxu0 %v268
        %v364 = vpop.f32.mrf.mxu0
        %v365 = vadd.f32 %v227, %v364
        %v366 = vpop.f32.mrf.mxu0
        %v367 = vpop.f32.mrf.mxu0
        %v368 = vadd.f32 %v227, %v367
        %v369 = vpop.f32.mrf.mxu0
        %370 = vdwg.mxu0
        %v371 = vpack.c.bf16 %v312, %v309
        %v372 = vpack.c.bf16 %v320, %v317
        %v373 = vpack.c.bf16 %v328, %v325
        %v374 = vpack.c.bf16 %v336, %v333
        %v375 = vpack.c.bf16 %v344, %v341
        %v376 = vpack.c.bf16 %v352, %v349
        %v377 = vpack.c.bf16 %v360, %v357
        %v378 = vpack.c.bf16 %v368, %v365
        %v387 = vunpack.c.l.b16 %v371
        %v388 = vunpack.c.h.b16 %v371
        %v389 = vunpack.c.l.b16 %v372
        %v390 = vunpack.c.h.b16 %v372
        %v391 = vunpack.c.l.b16 %v373
        %v392 = vunpack.c.h.b16 %v373
        %v393 = vunpack.c.l.b16 %v374
        %v394 = vunpack.c.h.b16 %v374
        %v395 = vunpack.c.l.b16 %v375
        %v396 = vunpack.c.h.b16 %v375
        %v397 = vunpack.c.l.b16 %v376
        %v398 = vunpack.c.h.b16 %v376
        %v399 = vunpack.c.l.b16 %v377
        %v400 = vunpack.c.h.b16 %v377
        %v401 = vunpack.c.l.b16 %v378
        %v402 = vunpack.c.h.b16 %v378
        %v403 = vpack.c.b16 %v387, %v387
        %v404 = vpack.c.b16 %v388, %v388
        %v405 = vpack.c.b16 %v389, %v389
        %v406 = vpack.c.b16 %v390, %v390
        %v407 = vpack.c.b16 %v391, %v391
        %v408 = vpack.c.b16 %v392, %v392
        %v409 = vpack.c.b16 %v393, %v393
        %v410 = vpack.c.b16 %v394, %v394
        %v411 = vpack.c.b16 %v395, %v395
        %v412 = vpack.c.b16 %v396, %v396
        %v413 = vpack.c.b16 %v397, %v397
        %v414 = vpack.c.b16 %v398, %v398
        %v415 = vpack.c.b16 %v399, %v399
        %v416 = vpack.c.b16 %v400, %v400
        %v417 = vpack.c.b16 %v401, %v401
        %v418 = vpack.c.b16 %v402, %v402
        %435 = vst [vmem:[%s216] sm:$0xf] %v403
        %436 = vst [vmem:[%s216 + $0x4] sm:$0xf] %v404
        %437 = vst [vmem:[%s216 + $0x8] sm:$0xf] %v405
        %438 = vst [vmem:[%s216 + $0xc] sm:$0xf] %v406
        %439 = vst [vmem:[%s216 + $0x10] sm:$0xf] %v407
        %440 = vst [vmem:[%s216 + $0x14] sm:$0xf] %v408
        %441 = vst [vmem:[%s216 + $0x18] sm:$0xf] %v409
        %442 = vst [vmem:[%s216 + $0x1c] sm:$0xf] %v410
        %443 = vst [vmem:[%s216 + $0x20] sm:$0xf] %v411
        %444 = vst [vmem:[%s216 + $0x24] sm:$0xf] %v412
        %445 = vst [vmem:[%s216 + $0x28] sm:$0xf] %v413
        %446 = vst [vmem:[%s216 + $0x2c] sm:$0xf] %v414
        %447 = vst [vmem:[%s216 + $0x30] sm:$0xf] %v415
        %448 = vst [vmem:[%s216 + $0x34] sm:$0xf] %v416
        %449 = vst [vmem:[%s216 + $0x38] sm:$0xf] %v417
        %450 = vst [vmem:[%s216 + $0x3c] sm:$0xf] %v418
        %s451 = sand.u32 %s113, 1
        %s452 = scalar_lea.sflag [#allocation4], %s451
        %s453 = sand.u32 %s113, 1
        %s454 = smul.addr %s453, 64
        %s455 = scalar_lea.vmem [#allocation7], %s454
        // Predicated region
        $region41: #{tpu_custom_call.1} parent=31 // pred_check
          %p456 = pneg %p123
        $region42: #{tpu_custom_call.1} parent=31 // pred_check_branch
          %458 = sbr.rel (%p456) target = $region44
        $region43: #{tpu_custom_call.1} parent=31 // pred_region
          %s459 = smul.u32 16, %s26
          %s461 = ssub.s32 1024, 1024
          %462 = vsyncadd %s452, %s461
          %s463 = smul.addr %s25, 32
          %s464 = sadd.s32 %s459, %s463
          %s465 = smul.addr %s464, 64
          %s466 = scalar_lea.hbm %s3, %s465
          %s467 = sshll.u32 %s455, 4
          %s468 = int_to_ptr.vmem [resolvable:$true] %s467
          %473 = dma.vmem_to_hbm [thread:$0]  %s468, 1024, %s466, %s452, 64, 64, 4
        $region44: #{tpu_custom_call.1} parent=31 // pred_fallthru
          _
      $region32: #{tpu_custom_call.1} parent=5 // pred_fallthru
        _
      %p474 = scmp.le.s32.totalorder 2, %s16
      // Predicated region
      $region45: #{tpu_custom_call.1} parent=5 // pred_check
        %p475 = pneg %p474
      $region46: #{tpu_custom_call.1} parent=5 // pred_check_branch
        %477 = sbr.rel (%p475) target = $region48
      $region47: #{tpu_custom_call.1} parent=5 // pred_region
        %s478 = ssub.s32 %s16, 2
        // Predicated region
        $region49: #{tpu_custom_call.1} parent=47 // pred_check
          %p479 = pneg %p129
        $region50: #{tpu_custom_call.1} parent=47 // pred_check_branch
          %481 = sbr.rel (%p479) target = $region52
        $region51: #{tpu_custom_call.1} parent=47 // pred_region
          %s482 = sand.u32 %s114, 1
          %s483 = scalar_lea.sflag [#allocation4], %s482
          %s484 = sand.u32 %s114, 1
          %s485 = smul.addr %s484, 64
          %s486 = scalar_lea.vmem [#allocation7], %s485
          %487 = dma.done %s483, 1024
        $region52: #{tpu_custom_call.1} parent=47 // pred_fallthru
          _
      $region48: #{tpu_custom_call.1} parent=5 // pred_fallthru
        _
    $region6: #{tpu_custom_call.1} parent=1 // loop_footer
      %s20 = sadd.s32 1, %s16
    $region7: #{tpu_custom_call.1} parent=1 // loop_footer_branch
      %15 = sbr.rel target = $region3
    $region8: #{tpu_custom_call.1} parent=1 // loop_exit
      _
    %488 = vsyncpa [#allocation3], 1
    %s489 = scalar_lea.sflag [#allocation3], 1
    %490 = vsyncpa %s489, 1
    %491 = vsyncpa [#allocation6], 1
    %492 = vsyncpa [#allocation4], 1
    %s493 = scalar_lea.sflag [#allocation4], 1
    %494 = vsyncpa %s493, 1

// kernel: tpu_custom_call.1
$region0: #{tpu_custom_call.1}
  #allocation0 [shape = 'u32[]', space=smem, size = 0x4, offset = 0x4, fixed_abs, tag = 'smem constant byte address 0x4 - core index']
  #allocation1 [shape = 'u32[144,128]{1,0:T(1,128)}', space=vmem, size = 0x12000, scoped, tag = 'internal scratch']
  %s0 = inlined_call_operand.hbm [shape: f32[2,8,256], index: 0, kind: input, shape index: {}]
  %s1 = inlined_call_operand.hbm [shape: bf16[8,128], index: 1, kind: input, shape index: {}]
  %s2 = inlined_call_operand.vmem [shape: f32[1,128], index: 2, kind: input, shape index: {}]
  %s3 = inlined_call_operand.hbm [shape: bf16[2,256,128], index: 3, kind: output, shape index: {}]
  %s4 = sld [smem:[#allocation0]]
  $region53: #{tpu_custom_call.1} parent=0
    _
  %s6 = ssub.s32 1, %s4
  %s7 = scalar_select 0, %s6, %s4
  $region1: #{tpu_custom_call.1} parent=0
    #allocation2 [shape = 'u8[8192]{0}', space=vmem, size = 0x2000, scoped, tag = 'input window, operand 0']
    #allocation3 [shape = 's32[2]{0}', space=sflag, size = 0x8, scoped, tag = 'scoped memory for tpu_custom_call.1']
    #allocation4 [shape = 's32[2]{0}', space=sflag, size = 0x8, scoped, tag = 'scoped memory for tpu_custom_call.1']
    #allocation5 [shape = 'u8[2048]{0}', space=vmem, size = 0x800, scoped, tag = 'input window, operand 1, single buffered']
    #allocation6 [shape = 's32[1]{0}', space=sflag, size = 0x4, scoped, tag = 'scoped memory for tpu_custom_call.1']
    #allocation7 [shape = 'u8[65536]{0}', space=vmem, size = 0x10000, scoped, tag = 'output window, operand 0']
    %8 = vsyncpa [#allocation3], 0
    %s9 = scalar_lea.sflag [#allocation3], 1
    %10 = vsyncpa %s9, 0
    %11 = vsyncpa [#allocation6], 0
    %12 = vsyncpa [#allocation4], 0
    %s13 = scalar_lea.sflag [#allocation4], 1
    %14 = vsyncpa %s13, 0
    loop: start=0, step=1, limit=6
    $region2: #{tpu_custom_call.1} parent=1 // loop_pre_header
      _
    $region3: #{tpu_custom_call.1} parent=1 // loop_header
      %s16 = sphi 0, %s20
      %p17 = scmp.ge.s32.totalorder %s16, 6
      %s23 = sphi 0, %s35
      %s24 = sphi 0, %s31
      %s25 = sphi 0, %s23
      %s26 = sphi 0, %s24
      %s27 = sphi 0, %s25
      %s28 = sphi 0, %s26
      %s40 = sphi 0, %s42
      %s43 = sphi 0, %s40
      %s44 = sphi 0, %s43
      %s60 = sphi 0, %s44
      %s64 = sphi 0, %s64
      %s66 = sphi 0, %s64
      %s67 = sphi 0, %s66
      %s81 = sphi 0, %s67
      %s85 = sphi 0, %s85
      %s87 = sphi 0, %s85
      %s88 = sphi 0, %s87
      %s102 = sphi 0, %s88
      %s110 = sphi 0, %s112
      %s113 = sphi 0, %s110
      %s114 = sphi 0, %s113
      %s130 = sphi 0, %s114
    $region4: #{tpu_custom_call.1} parent=1 // loop_header_branch
      %19 = sbr.rel (%p17) target = $region8
    $region5: #{tpu_custom_call.1} parent=1 // loop_body
      %s21 = ssub.s32 %s16, 1
      %s22 = ssub.s32 %s16, 2
      %s29 = sadd.s32 1, %s24
      %p30 = scmp.ge.s32.totalorder %s29, 2
      %s31 = scalar_select %p30, 0, %s29
      %s32 = sadd.s32 1, %s23
      %s33 = scalar_select %p30, %s32, %s23
      %p34 = scmp.ge.s32.totalorder %s33, 2
      %s35 = scalar_select %p34, 0, %s33
      %s36 = ssub.s32 %s23, %s35
      %s37 = ssub.s32 %s24, %s31
      %s38 = sor.u32 %s36, %s37
      %p39 = scmp.eq.s32.totalorder %s38, 0
      %s41 = sadd.s32 %s40, 1
      %s42 = scalar_select %p39, %s40, %s41
      %p45 = pneg %p39
      %p46 = scmp.eq.s32.totalorder %s16, 3
      %p47 = por %p45, %p46
      %p48 = scmp.ne.s32.totalorder %s40, %s43
      %p49 = scmp.eq.s32.totalorder %s16, 0
      %p50 = por %p48, %p49
      %p51 = scmp.ne.s32.totalorder %s40, %s43
      %p52 = scmp.eq.s32.totalorder %s21, 3
      %p53 = por %p51, %p52
      %p54 = scmp.ne.s32.totalorder %s43, %s44
      %p55 = scmp.eq.s32.totalorder %s21, 0
      %p56 = por %p54, %p55
      %p57 = scmp.ne.s32.totalorder %s43, %s44
      %p58 = scmp.eq.s32.totalorder %s22, 3
      %p59 = por %p57, %p58
      %p61 = scmp.ne.s32.totalorder %s44, %s60
      %p62 = scmp.eq.s32.totalorder %s22, 0
      %p63 = por %p61, %p62
      %s65 = sadd.s32 %s64, 1
      %p68 = scmp.eq.s32.totalorder %s16, 3
      %p69 = scmp.ne.s32.totalorder %s64, %s66
      %p70 = scmp.eq.s32.totalorder %s16, 0
      %p71 = por %p69, %p70
      %p72 = scmp.ne.s32.totalorder %s64, %s66
      %p73 = scmp.eq.s32.totalorder %s21, 3
      %p74 = por %p72, %p73
      %p75 = scmp.ne.s32.totalorder %s66, %s67
      %p76 = scmp.eq.s32.totalorder %s21, 0
      %p77 = por %p75, %p76
      %p78 = scmp.ne.s32.totalorder %s66, %s67
      %p79 = scmp.eq.s32.totalorder %s22, 3
      %p80 = por %p78, %p79
      %p82 = scmp.ne.s32.totalorder %s67, %s81
      %p83 = scmp.eq.s32.totalorder %s22, 0
      %p84 = por %p82, %p83
      %s86 = sadd.s32 %s85, 1
      %p89 = scmp.eq.s32.totalorder %s16, 3
      %p90 = scmp.ne.s32.totalorder %s85, %s87
      %p91 = scmp.eq.s32.totalorder %s16, 0
      %p92 = por %p90, %p91
      %p93 = scmp.ne.s32.totalorder %s85, %s87
      %p94 = scmp.eq.s32.totalorder %s21, 3
      %p95 = por %p93, %p94
      %p96 = scmp.ne.s32.totalorder %s87, %s88
      %p97 = scmp.eq.s32.totalorder %s21, 0
      %p98 = por %p96, %p97
      %p99 = scmp.ne.s32.totalorder %s87, %s88
      %p100 = scmp.eq.s32.totalorder %s22, 3
      %p101 = por %p99, %p100
      %p103 = scmp.ne.s32.totalorder %s88, %s102
      %p104 = scmp.eq.s32.totalorder %s22, 0
      %p105 = por %p103, %p104
      %s106 = ssub.s32 %s23, %s35
      %s107 = ssub.s32 %s24, %s31
      %s108 = sor.u32 %s106, %s107
      %p109 = scmp.eq.s32.totalorder %s108, 0
      %s111 = sadd.s32 %s110, 1
      %s112 = scalar_select %p109, %s110, %s111
      %p115 = pneg %p109
      %p116 = scmp.eq.s32.totalorder %s16, 3
      %p117 = por %p115, %p116
      %p118 = scmp.ne.s32.totalorder %s110, %s113
      %p119 = scmp.eq.s32.totalorder %s16, 0
      %p120 = por %p118, %p119
      %p121 = scmp.ne.s32.totalorder %s110, %s113
      %p122 = scmp.eq.s32.totalorder %s21, 3
      %p123 = por %p121, %p122
      %p124 = scmp.ne.s32.totalorder %s113, %s114
      %p125 = scmp.eq.s32.totalorder %s21, 0
      %p126 = por %p124, %p125
      %p127 = scmp.ne.s32.totalorder %s113, %s114
      %p128 = scmp.eq.s32.totalorder %s22, 3
      %p129 = por %p127, %p128
      %p131 = scmp.ne.s32.totalorder %s114, %s130
      %p132 = scmp.eq.s32.totalorder %s22, 0
      %p133 = por %p131, %p132
      %p134 = scmp.le.s32.totalorder 1, %s16
      %p135 = scmp.lt.s32.totalorder %s16, 5
      %p136 = pnand %p134, %p135
      %p137 = pneg %p136
      // Predicated region
      $region9: #{tpu_custom_call.1} parent=5 // pred_check
        _
      $region10: #{tpu_custom_call.1} parent=5 // pred_check_branch
        %139 = sbr.rel (%p136) target = $region12
      $region11: #{tpu_custom_call.1} parent=5 // pred_region
        %s140 = ssub.s32 %s16, 1
        // Predicated region
        $region13: #{tpu_custom_call.1} parent=11 // pred_check
          %p141 = pneg %p77
        $region14: #{tpu_custom_call.1} parent=11 // pred_check_branch
          %143 = sbr.rel (%p141) target = $region16
        $region15: #{tpu_custom_call.1} parent=11 // pred_region
          %s145 = ssub.s32 64, 64
          %146 = vsyncadd [#allocation6], %s145
          %s148 = sshll.u32 [#allocation5], 4
          %s149 = int_to_ptr.vmem [resolvable:$true] %s148
          %151 = dma.hbm_to_vmem [thread:$0]  %s1, 64, %s149, [#allocation6]
        $region16: #{tpu_custom_call.1} parent=11 // pred_fallthru
          _
        // Predicated region
        $region17: #{tpu_custom_call.1} parent=11 // pred_check
          %p152 = pneg %p98
        $region18: #{tpu_custom_call.1} parent=11 // pred_check_branch
          %154 = sbr.rel (%p152) target = $region20
        $region19: #{tpu_custom_call.1} parent=11 // pred_region
          _
        $region20: #{tpu_custom_call.1} parent=11 // pred_fallthru
          _
      $region12: #{tpu_custom_call.1} parent=5 // pred_fallthru
        _
      %p155 = scmp.lt.s32.totalorder %s16, 4
      // Predicated region
      $region21: #{tpu_custom_call.1} parent=5 // pred_check
        %p156 = pneg %p155
      $region22: #{tpu_custom_call.1} parent=5 // pred_check_branch
        %158 = sbr.rel (%p156) target = $region24
      $region23: #{tpu_custom_call.1} parent=5 // pred_region
        // Predicated region
        $region25: #{tpu_custom_call.1} parent=23 // pred_check
          %p159 = pneg %p50
        $region26: #{tpu_custom_call.1} parent=23 // pred_check_branch
          %161 = sbr.rel (%p159) target = $region28
        $region27: #{tpu_custom_call.1} parent=23 // pred_region
          %s162 = sand.u32 %s40, 1
          %s163 = scalar_lea.sflag [#allocation3], %s162
          %s164 = sand.u32 %s40, 1
          %s165 = smul.addr %s164, 8
          %s166 = scalar_lea.vmem [#allocation2], %s165
          %s168 = ssub.s32 128, 128
          %169 = vsyncadd %s163, %s168
          %s170 = smul.addr %s23, 2
          %s171 = sadd.s32 %s24, %s170
          %s172 = smul.addr %s171, 128
          %s173 = scalar_lea.hbm %s0, %s172
          %s175 = sshll.u32 %s166, 4
          %s176 = int_to_ptr.vmem [resolvable:$true] %s175
          %178 = dma.hbm_to_vmem [thread:$0]  %s173, 128, %s176, %s163
        $region28: #{tpu_custom_call.1} parent=23 // pred_fallthru
          _
      $region24: #{tpu_custom_call.1} parent=5 // pred_fallthru
        _
      %p179 = scmp.le.s32.totalorder 1, %s16
      %p180 = scmp.lt.s32.totalorder %s16, 5
      %p181 = pnand %p179, %p180
      %p182 = pneg %p181
      // Predicated region
      $region29: #{tpu_custom_call.1} parent=5 // pred_check
        _
      $region30: #{tpu_custom_call.1} parent=5 // pred_check_branch
        %184 = sbr.rel (%p181) target = $region32
      $region31: #{tpu_custom_call.1} parent=5 // pred_region
        %s185 = ssub.s32 %s16, 1
        %s186 = sand.u32 %s43, 1
        %s187 = scalar_lea.sflag [#allocation3], %s186
        %s188 = sand.u32 %s43, 1
        %s189 = smul.addr %s188, 8
        %s190 = scalar_lea.vmem [#allocation2], %s189
        // Predicated region
        $region33: #{tpu_custom_call.1} parent=31 // pred_check
          %p191 = pneg %p56
        $region34: #{tpu_custom_call.1} parent=31 // pred_check_branch
          %193 = sbr.rel (%p191) target = $region36
        $region35: #{tpu_custom_call.1} parent=31 // pred_region
          %194 = dma.done %s187, 128
        $region36: #{tpu_custom_call.1} parent=31 // pred_fallthru
          _
        // Predicated region
        $region37: #{tpu_custom_call.1} parent=31 // pred_check
          %p195 = pneg %p77
        $region38: #{tpu_custom_call.1} parent=31 // pred_check_branch
          %197 = sbr.rel (%p195) target = $region40
        $region39: #{tpu_custom_call.1} parent=31 // pred_region
          %198 = dma.done [#allocation6], 64
        $region40: #{tpu_custom_call.1} parent=31 // pred_fallthru
          _
        %s199 = sand.u32 %s43, 1
        %s200 = scalar_lea.sflag [#allocation3], %s199
        %s201 = sand.u32 %s43, 1
        %s202 = smul.addr %s201, 8
        %s203 = scalar_lea.vmem [#allocation2], %s202
        %p204 = pneg %p56
        %p205 = pneg %p53
        %p206 = pneg %p77
        %p207 = pneg %p74
        %p208 = pneg %p98
        %p209 = pneg %p95
        %p210 = pneg %p126
        %p211 = pneg %p123
        %s212 = sand.u32 %s113, 1
        %s213 = scalar_lea.sflag [#allocation4], %s212
        %s214 = sand.u32 %s113, 1
        %s215 = smul.addr %s214, 64
        %s216 = scalar_lea.vmem [#allocation7], %s215
        %s217 = smul.u32 16, %s26
        %v219 = vld [vmem:[%s190] sm:$0xff]
        %v220 = vpack.c.bf16 %v219, %v219
        %v221 = vld [vmem:[#allocation5] sm:$0xf]
        %v222 = vld [vmem:[%s2] sm:$0x1]
        %v224 = vlaneseq
        %v225 = vshrl.u32 %v224, 7
        %v226 = vsub.s32 0, %v225
        %v227 = vrot.slane %v222, %v226
        %229 = vxpose.xlu0.c.b16.start [1/8] %v220, 128
        %230 = vxpose.xlu0.c.b16.cont [2/8] 0, 128
        %231 = vxpose.xlu0.c.b16.cont [3/8] 0, 128
        %232 = vxpose.xlu0.c.b16.cont [4/8] 0, 128
        %233 = vxpose.xlu0.c.b16.cont [5/8] 0, 128
        %234 = vxpose.xlu0.c.b16.cont [6/8] 0, 128
        %235 = vxpose.xlu0.c.b16.cont [7/8] 0, 128
        %236 = vxpose.xlu0.c.b16.end [8/8] 0, 128
        %v237 = vpop.trf.xlu0
        %v238 = vpop.trf.xlu0
        %v239 = vpop.trf.xlu0
        %v240 = vpop.trf.xlu0
        %v241 = vpop.trf.xlu0
        %v242 = vpop.trf.xlu0
        %v243 = vpop.trf.xlu0
        %v244 = vpop.trf.xlu0
        %vm245 = vcmask 64512
        %v247 = vsel %vm245, %v237, 0
        %v250 = vsel %vm245, %v238, 0
        %v253 = vsel %vm245, %v239, 0
        %v256 = vsel %vm245, %v240, 0
        %v259 = vsel %vm245, %v241, 0
        %v262 = vsel %vm245, %v242, 0
        %v265 = vsel %vm245, %v243, 0
        %v268 = vsel %vm245, %v244, 0
        %vm270 = vcmask 1043456
        %v272 = vsel %vm270, %v221, 0
        %274 = vmatprep.subr.bf16.mxu0 0
        %275 = vmatpush1.bf16.msra.mxu0 0
        %276 = vmatprep.subr.bf16.mxu0 0
        %277 = vmatpush1.bf16.msra.mxu0 0
        %278 = vmatprep.subr.bf16.mxu0 0
        %279 = vmatpush1.bf16.msra.mxu0 0
        %280 = vmatprep.subr.bf16.mxu0 0
        %281 = vmatpush1.bf16.msra.mxu0 0
        %282 = vmatprep.subr.bf16.mxu0 0
        %283 = vmatpush1.bf16.msra.mxu0 0
        %284 = vmatprep.subr.bf16.mxu0 0
        %285 = vmatpush1.bf16.msra.mxu0 0
        %286 = vmatprep.subr.bf16.mxu0 0
        %287 = vmatpush1.bf16.msra.mxu0 0
        %288 = vmatprep.subr.bf16.mxu0 0
        %289 = vmatpush1.bf16.msra.mxu0 %v272
        %290 = vmatprep.subr.bf16.mxu0 0
        %291 = vmatpush2.bf16.msra.mxu0 0
        %292 = vmatprep.subr.bf16.mxu0 0
        %293 = vmatpush2.bf16.msra.mxu0 0
        %294 = vmatprep.subr.bf16.mxu0 0
        %295 = vmatpush2.bf16.msra.mxu0 0
        %296 = vmatprep.subr.bf16.mxu0 0
        %297 = vmatpush2.bf16.msra.mxu0 0
        %298 = vmatprep.subr.bf16.mxu0 0
        %299 = vmatpush2.bf16.msra.mxu0 0
        %300 = vmatprep.subr.bf16.mxu0 0
        %301 = vmatpush2.bf16.msra.mxu0 0
        %302 = vmatprep.subr.bf16.mxu0 0
        %303 = vmatpush2.bf16.msra.mxu0 0
        %304 = vmatprep.subr.bf16.mxu0 0
        %305 = vmatpush2.bf16.msra.mxu0 0
        %306 = vmatprep.mubr.bf16.mxu0 0
        %307 = vmatmul.mubr.bf16.gmra.mxu0 %v247
        %v308 = vpop.f32.mrf.mxu0
        %v309 = vadd.f32 %v227, %v308
        %v310 = vpop.f32.mrf.mxu0
        %v311 = vpop.f32.mrf.mxu0
        %v312 = vadd.f32 %v227, %v311
        %v313 = vpop.f32.mrf.mxu0
        %314 = vmatprep.mubr.bf16.mxu0 0
        %315 = vmatmul.mubr.bf16.gmra.mxu0 %v250
        %v316 = vpop.f32.mrf.mxu0
        %v317 = vadd.f32 %v227, %v316
        %v318 = vpop.f32.mrf.mxu0
        %v319 = vpop.f32.mrf.mxu0
        %v320 = vadd.f32 %v227, %v319
        %v321 = vpop.f32.mrf.mxu0
        %322 = vmatprep.mubr.bf16.mxu0 0
        %323 = vmatmul.mubr.bf16.gmra.mxu0 %v253
        %v324 = vpop.f32.mrf.mxu0
        %v325 = vadd.f32 %v227, %v324
        %v326 = vpop.f32.mrf.mxu0
        %v327 = vpop.f32.mrf.mxu0
        %v328 = vadd.f32 %v227, %v327
        %v329 = vpop.f32.mrf.mxu0
        %330 = vmatprep.mubr.bf16.mxu0 0
        %331 = vmatmul.mubr.bf16.gmra.mxu0 %v256
        %v332 = vpop.f32.mrf.mxu0
        %v333 = vadd.f32 %v227, %v332
        %v334 = vpop.f32.mrf.mxu0
        %v335 = vpop.f32.mrf.mxu0
        %v336 = vadd.f32 %v227, %v335
        %v337 = vpop.f32.mrf.mxu0
        %338 = vmatprep.mubr.bf16.mxu0 0
        %339 = vmatmul.mubr.bf16.gmra.mxu0 %v259
        %v340 = vpop.f32.mrf.mxu0
        %v341 = vadd.f32 %v227, %v340
        %v342 = vpop.f32.mrf.mxu0
        %v343 = vpop.f32.mrf.mxu0
        %v344 = vadd.f32 %v227, %v343
        %v345 = vpop.f32.mrf.mxu0
        %346 = vmatprep.mubr.bf16.mxu0 0
        %347 = vmatmul.mubr.bf16.gmra.mxu0 %v262
        %v348 = vpop.f32.mrf.mxu0
        %v349 = vadd.f32 %v227, %v348
        %v350 = vpop.f32.mrf.mxu0
        %v351 = vpop.f32.mrf.mxu0
        %v352 = vadd.f32 %v227, %v351
        %v353 = vpop.f32.mrf.mxu0
        %354 = vmatprep.mubr.bf16.mxu0 0
        %355 = vmatmul.mubr.bf16.gmra.mxu0 %v265
        %v356 = vpop.f32.mrf.mxu0
        %v357 = vadd.f32 %v227, %v356
        %v358 = vpop.f32.mrf.mxu0
        %v359 = vpop.f32.mrf.mxu0
        %v360 = vadd.f32 %v227, %v359
        %v361 = vpop.f32.mrf.mxu0
        %362 = vmatprep.mubr.bf16.mxu0 0
        %363 = vmatmul.mubr.bf16.gmra.mxu0 %v268
        %v364 = vpop.f32.mrf.mxu0
        %v365 = vadd.f32 %v227, %v364
        %v366 = vpop.f32.mrf.mxu0
        %v367 = vpop.f32.mrf.mxu0
        %v368 = vadd.f32 %v227, %v367
        %v369 = vpop.f32.mrf.mxu0
        %370 = vdwg.mxu0
        %v371 = vpack.c.bf16 %v312, %v309
        %v372 = vpack.c.bf16 %v320, %v317
        %v373 = vpack.c.bf16 %v328, %v325
        %v374 = vpack.c.bf16 %v336, %v333
        %v375 = vpack.c.bf16 %v344, %v341
        %v376 = vpack.c.bf16 %v352, %v349
        %v377 = vpack.c.bf16 %v360, %v357
        %v378 = vpack.c.bf16 %v368, %v365
        %v387 = vunpack.c.l.b16 %v371
        %v388 = vunpack.c.h.b16 %v371
        %v389 = vunpack.c.l.b16 %v372
        %v390 = vunpack.c.h.b16 %v372
        %v391 = vunpack.c.l.b16 %v373
        %v392 = vunpack.c.h.b16 %v373
        %v393 = vunpack.c.l.b16 %v374
        %v394 = vunpack.c.h.b16 %v374
        %v395 = vunpack.c.l.b16 %v375
        %v396 = vunpack.c.h.b16 %v375
        %v397 = vunpack.c.l.b16 %v376
        %v398 = vunpack.c.h.b16 %v376
        %v399 = vunpack.c.l.b16 %v377
        %v400 = vunpack.c.h.b16 %v377
        %v401 = vunpack.c.l.b16 %v378
        %v402 = vunpack.c.h.b16 %v378
        %v403 = vpack.c.b16 %v387, %v387
        %v404 = vpack.c.b16 %v388, %v388
        %v405 = vpack.c.b16 %v389, %v389
        %v406 = vpack.c.b16 %v390, %v390
        %v407 = vpack.c.b16 %v391, %v391
        %v408 = vpack.c.b16 %v392, %v392
        %v409 = vpack.c.b16 %v393, %v393
        %v410 = vpack.c.b16 %v394, %v394
        %v411 = vpack.c.b16 %v395, %v395
        %v412 = vpack.c.b16 %v396, %v396
        %v413 = vpack.c.b16 %v397, %v397
        %v414 = vpack.c.b16 %v398, %v398
        %v415 = vpack.c.b16 %v399, %v399
        %v416 = vpack.c.b16 %v400, %v400
        %v417 = vpack.c.b16 %v401, %v401
        %v418 = vpack.c.b16 %v402, %v402
        %435 = vst [vmem:[%s216] sm:$0xf] %v403
        %436 = vst [vmem:[%s216 + $0x4] sm:$0xf] %v404
        %437 = vst [vmem:[%s216 + $0x8] sm:$0xf] %v405
        %438 = vst [vmem:[%s216 + $0xc] sm:$0xf] %v406
        %439 = vst [vmem:[%s216 + $0x10] sm:$0xf] %v407
        %440 = vst [vmem:[%s216 + $0x14] sm:$0xf] %v408
        %441 = vst [vmem:[%s216 + $0x18] sm:$0xf] %v409
        %442 = vst [vmem:[%s216 + $0x1c] sm:$0xf] %v410
        %443 = vst [vmem:[%s216 + $0x20] sm:$0xf] %v411
        %444 = vst [vmem:[%s216 + $0x24] sm:$0xf] %v412
        %445 = vst [vmem:[%s216 + $0x28] sm:$0xf] %v413
        %446 = vst [vmem:[%s216 + $0x2c] sm:$0xf] %v414
        %447 = vst [vmem:[%s216 + $0x30] sm:$0xf] %v415
        %448 = vst [vmem:[%s216 + $0x34] sm:$0xf] %v416
        %449 = vst [vmem:[%s216 + $0x38] sm:$0xf] %v417
        %450 = vst [vmem:[%s216 + $0x3c] sm:$0xf] %v418
        %s451 = sand.u32 %s113, 1
        %s452 = scalar_lea.sflag [#allocation4], %s451
        %s453 = sand.u32 %s113, 1
        %s454 = smul.addr %s453, 64
        %s455 = scalar_lea.vmem [#allocation7], %s454
        // Predicated region
        $region41: #{tpu_custom_call.1} parent=31 // pred_check
          %p456 = pneg %p123
        $region42: #{tpu_custom_call.1} parent=31 // pred_check_branch
          %458 = sbr.rel (%p456) target = $region44
        $region43: #{tpu_custom_call.1} parent=31 // pred_region
          %s459 = smul.u32 16, %s26
          %s461 = ssub.s32 1024, 1024
          %462 = vsyncadd %s452, %s461
          %s463 = smul.addr %s25, 32
          %s464 = sadd.s32 %s459, %s463
          %s465 = smul.addr %s464, 64
          %s466 = scalar_lea.hbm %s3, %s465
          %s467 = sshll.u32 %s455, 4
          %s468 = int_to_ptr.vmem [resolvable:$true] %s467
          %473 = dma.vmem_to_hbm [thread:$0]  %s468, 1024, %s466, %s452, 64, 64, 4
        $region44: #{tpu_custom_call.1} parent=31 // pred_fallthru
          _
      $region32: #{tpu_custom_call.1} parent=5 // pred_fallthru
        _
      %p474 = scmp.le.s32.totalorder 2, %s16
      // Predicated region
      $region45: #{tpu_custom_call.1} parent=5 // pred_check
        %p475 = pneg %p474
      $region46: #{tpu_custom_call.1} parent=5 // pred_check_branch
        %477 = sbr.rel (%p475) target = $region48
      $region47: #{tpu_custom_call.1} parent=5 // pred_region
        %s478 = ssub.s32 %s16, 2
        // Predicated region
        $region49: #{tpu_custom_call.1} parent=47 // pred_check
          %p479 = pneg %p129
        $region50: #{tpu_custom_call.1} parent=47 // pred_check_branch
          %481 = sbr.rel (%p479) target = $region52
        $region51: #{tpu_custom_call.1} parent=47 // pred_region
          %s482 = sand.u32 %s114, 1
          %s483 = scalar_lea.sflag [#allocation4], %s482
          %s484 = sand.u32 %s114, 1
          %s485 = smul.addr %s484, 64
          %s486 = scalar_lea.vmem [#allocation7], %s485
          %487 = dma.done %s483, 1024
        $region52: #{tpu_custom_call.1} parent=47 // pred_fallthru
          _
      $region48: #{tpu_custom_call.1} parent=5 // pred_fallthru
        _
    $region6: #{tpu_custom_call.1} parent=1 // loop_footer
      %s20 = sadd.s32 1, %s16
    $region7: #{tpu_custom_call.1} parent=1 // loop_footer_branch
      %15 = sbr.rel target = $region3
    $region8: #{tpu_custom_call.1} parent=1 // loop_exit
      _
    %488 = vsyncpa [#allocation3], 1
    %s489 = scalar_lea.sflag [#allocation3], 1
    %490 = vsyncpa %s489, 1
    %491 = vsyncpa [#allocation6], 1
    %492 = vsyncpa [#allocation4], 1
    %s493 = scalar_lea.sflag [#allocation4], 1
    %494 = vsyncpa %s493, 1

</llo_original>
